<compile_context>
chip_gen: v7x
topology: tpu7x:2x2x1
jax: 0.10.0
libtpu: 0.0.40
codegen_flags: <defaults>
</compile_context>

<pallas_src>
import jax
import jax.numpy as jnp
from jax import lax
from jax.experimental import pallas as pl
from jax.experimental.pallas import tpu as pltpu


def _round_up(x, m):
    return ((x + m - 1) // m) * m


def value_network_kernel(state_ref, action_ref,
                         w1_ref, b1_ref,
                         w2s_ref, w2a_ref, b2_ref,
                         w3t_ref, b3t_ref,
                         out_ref):
    cd = w1_ref.dtype  # compute dtype for the MXU operands (f32 or bf16)

    # linear1 + relu (accumulate in f32, bias/ReLU in f32 on the VPU)
    x = jnp.dot(state_ref[...].astype(cd), w1_ref[...],
                preferred_element_type=jnp.float32)
    x = jnp.maximum(x + b1_ref[...], 0.0)

    # concat(x, action) @ W2  ==  x @ W2[:h1] + action @ W2[h1:]
    h = (jnp.dot(x.astype(cd), w2s_ref[...],
                 preferred_element_type=jnp.float32)
         + jnp.dot(action_ref[...].astype(cd), w2a_ref[...],
                   preferred_element_type=jnp.float32))
    h = jnp.maximum(h + b2_ref[...], 0.0)

    # linear3, lane-transposed: (8, h2) contracted with (tb, h2) -> (8, tb).
    # Row 0 holds q; rows 1..7 are zero padding of W3^T / b3.
    q = lax.dot_general(w3t_ref[...], h.astype(cd),
                        dimension_numbers=(((1,), (1,)), ((), ())),
                        preferred_element_type=jnp.float32)
    out_ref[...] = (q + b3t_ref[...]).astype(out_ref.dtype)


def prepare_params(params, compute_dtype=jnp.float32):
    """One-time weight prep: split W2 (fuses the concat), transpose + row-pad
    W3 to (8, h2) for the lane-dense output, optional bf16 cast of the matmul
    operands. Biases stay f32 (added after the f32 accumulation)."""
    w1, b1, w2, b2, w3, b3 = (params["w1"], params["b1"], params["w2"],
                              params["b2"], params["w3"], params["b3"])
    h1 = w1.shape[1]
    h2 = w2.shape[1]
    cd = compute_dtype

    w3t = jnp.zeros((8, h2), cd).at[0, :].set(w3[:, 0].astype(cd))
    b3t = jnp.zeros((8, 1), jnp.float32).at[0, 0].set(b3[0].astype(jnp.float32))

    return {
        "w1": w1.astype(cd),
        "b1": b1.reshape(1, -1).astype(jnp.float32),
        "w2s": w2[:h1, :].astype(cd),
        "w2a": w2[h1:, :].astype(cd),
        "b2": b2.reshape(1, -1).astype(jnp.float32),
        "w3t": w3t,
        "b3t": b3t,
    }


def _choose_batch_tile(B, block_b):
    """Pick (tb, B_p). Small batches: one full-dim tile. Large batches: a
    128-multiple tile with >= 2 grid steps (v7x megacore sharding)."""
    B8 = _round_up(max(B, 1), 8)
    if B8 <= 128:
        return B8, B8
    tb = max(128, min(_round_up(block_b, 128),
                      _round_up(pl.cdiv(B8, 2), 128)))
    B_p = _round_up(B8, tb)
    return tb, B_p


def value_network_forward(state, action, prepared, *, block_b=1024):
    """state: (B, input_size), action: (B, action_size). Returns (B, 1)."""
    B, input_size = state.shape
    action_size = action.shape[1]
    h1 = prepared["w1"].shape[1]
    h2 = prepared["w2s"].shape[1]
    out_dtype = state.dtype

    tb, B_p = _choose_batch_tile(B, block_b)
    if B_p != B:
        pad = ((0, B_p - B), (0, 0))
        state_in = jnp.pad(state, pad)
        action_in = jnp.pad(action, pad)
    else:
        state_in, action_in = state, action

    grid = (B_p // tb,)

    def batch_spec(feat):
        return pl.BlockSpec((tb, feat), lambda i: (i, 0))

    def const_spec(rows, cols):
        return pl.BlockSpec((rows, cols), lambda i: (0, 0))

    in_bpe = state.dtype.itemsize
    w_bpe = prepared["w1"].dtype.itemsize
    flops = 2 * B_p * (input_size * h1 + (h1 + action_size) * h2 + h2 * 8)
    bytes_accessed = (B_p * (input_size + action_size) * in_bpe
                      + (input_size * h1 + h1 * h2 + action_size * h2
                         + 8 * h2) * w_bpe
                      + (h1 + h2 + 8) * 4
                      + 8 * B_p * 4)

    out_padded = pl.pallas_call(
        value_network_kernel,
        out_shape=jax.ShapeDtypeStruct((8, B_p), jnp.float32),
        grid=grid,
        in_specs=[
            batch_spec(input_size),            # state tile      (tb, in)
            batch_spec(action_size),           # action tile     (tb, act)
            const_spec(input_size, h1),        # W1              (in, h1)
            const_spec(1, h1),                 # b1
            const_spec(h1, h2),                # W2 (state part) (h1, h2)
            const_spec(action_size, h2),       # W2 (action part)(act, h2)
            const_spec(1, h2),                 # b2
            const_spec(8, h2),                 # W3^T, row-padded to 8
            const_spec(8, 1),                  # b3,  row-padded to 8
        ],
        out_specs=pl.BlockSpec((8, tb), lambda i: (0, i)),
        compiler_params=pltpu.CompilerParams(
            dimension_semantics=("parallel",),
        ),
        cost_estimate=pl.CostEstimate(flops=flops, transcendentals=0,
                                      bytes_accessed=bytes_accessed),
    )(state_in, action_in,
      prepared["w1"], prepared["b1"],
      prepared["w2s"], prepared["w2a"], prepared["b2"],
      prepared["w3t"], prepared["b3t"])

    # q lives in row 0; padded batch columns are discarded.
    return out_padded[0, :B][:, None].astype(out_dtype)


def init_params(key, input_size, action_size, hidden_size_1, hidden_size_2):
    """Deterministic synthetic init (uniform, PyTorch-Linear-like bounds).
    Weights stored as (in_features, out_features)."""
    ks = jax.random.split(key, 6)

    def lin(kw, kb, fan_in, fan_out):
        bound = 1.0 / jnp.sqrt(jnp.float32(fan_in))
        w = jax.random.uniform(kw, (fan_in, fan_out), jnp.float32, -bound, bound)
        b = jax.random.uniform(kb, (fan_out,), jnp.float32, -bound, bound)
        return w, b

    w1, b1 = lin(ks[0], ks[1], input_size, hidden_size_1)
    w2, b2 = lin(ks[2], ks[3], hidden_size_1 + action_size, hidden_size_2)
    w3, b3 = lin(ks[4], ks[5], hidden_size_2, 1)
    return {"w1": w1, "b1": b1, "w2": w2, "b2": b2, "w3": w3, "b3": b3}


def reference_forward(state, action, params):
    x = jax.nn.relu(state @ params["w1"] + params["b1"])
    x = jnp.concatenate([x, action], axis=1)
    x = jax.nn.relu(x @ params["w2"] + params["b2"])
    return x @ params["w3"] + params["b3"]


if __name__ == "__main__":
    B, input_size, action_size = 2, 16, 4
    hidden_size_1, hidden_size_2 = 32, 32

    key = jax.random.PRNGKey(0)
    k_state, k_action, k_params = jax.random.split(key, 3)
    state = jax.random.normal(k_state, (B, input_size), jnp.float32)
    action = jax.random.normal(k_action, (B, action_size), jnp.float32)
    params = init_params(k_params, input_size, action_size,
                         hidden_size_1, hidden_size_2)
    ref = reference_forward(state, action, params)

    # f32 path (default): bit-level-tight vs. the f32 reference.
    prepared_f32 = prepare_params(params, jnp.float32)
    out_f32 = jax.block_until_ready(
        value_network_forward(state, action, prepared_f32))
    assert out_f32.shape == (B, 1), out_f32.shape
    assert jnp.allclose(out_f32, ref, atol=1e-5, rtol=1e-5), (out_f32, ref)

    # bf16 matmul path (native MXU fast path on v5e/v6e/v7x), f32 accumulate.
    prepared_bf16 = prepare_params(params, jnp.bfloat16)
    out_bf16 = jax.block_until_ready(
        value_network_forward(state, action, prepared_bf16))
    assert out_bf16.shape == (B, 1), out_bf16.shape
    assert jnp.allclose(out_bf16, ref, atol=5e-2, rtol=5e-2), (out_bf16, ref)

    print("KERNEL_OK")
</pallas_src>

<mosaic_0001>
module attributes {stable_mosaic.version = 11 : i64} {
  func.func @value_network_kernel(%arg0: i32, %arg1: memref<8x16xf32, #tpu.memory_space<vmem>>, %arg2: memref<8x4xf32, #tpu.memory_space<vmem>>, %arg3: memref<16x32xf32, #tpu.memory_space<vmem>>, %arg4: memref<1x32xf32, #tpu.memory_space<vmem>>, %arg5: memref<32x32xf32, #tpu.memory_space<vmem>>, %arg6: memref<4x32xf32, #tpu.memory_space<vmem>>, %arg7: memref<1x32xf32, #tpu.memory_space<vmem>>, %arg8: memref<8x32xf32, #tpu.memory_space<vmem>>, %arg9: memref<8x1xf32, #tpu.memory_space<vmem>>, %arg10: memref<8x8xf32, #tpu.memory_space<vmem>>) attributes {dimension_semantics = [#tpu.dimension_semantics<parallel>], iteration_bounds = array<i64: 1>, scalar_prefetch = 0 : i64, scratch_operands = 0 : i64, tpu.core_type = #tpu.core_type<tc>, window_params = [{transform_indices = @transform_0, window_bounds = array<i64: 8, 16>}, {transform_indices = @transform_1, window_bounds = array<i64: 8, 4>}, {pipeline_mode = #tpu.pipeline_mode<synchronous>, transform_indices = @transform_2, window_bounds = array<i64: 16, 32>}, {pipeline_mode = #tpu.pipeline_mode<synchronous>, transform_indices = @transform_3, window_bounds = array<i64: 1, 32>}, {pipeline_mode = #tpu.pipeline_mode<synchronous>, transform_indices = @transform_4, window_bounds = array<i64: 32, 32>}, {pipeline_mode = #tpu.pipeline_mode<synchronous>, transform_indices = @transform_5, window_bounds = array<i64: 4, 32>}, {pipeline_mode = #tpu.pipeline_mode<synchronous>, transform_indices = @transform_6, window_bounds = array<i64: 1, 32>}, {pipeline_mode = #tpu.pipeline_mode<synchronous>, transform_indices = @transform_7, window_bounds = array<i64: 8, 32>}, {pipeline_mode = #tpu.pipeline_mode<synchronous>, transform_indices = @transform_8, window_bounds = array<i64: 8, 1>}, {transform_indices = @transform_9, window_bounds = array<i64: 8, 8>}]} {
    %c0 = arith.constant 0 : index
    %c0_0 = arith.constant 0 : index
    %0 = vector.load %arg1[%c0, %c0_0] : memref<8x16xf32, #tpu.memory_space<vmem>>, vector<8x16xf32>
    %c0_1 = arith.constant 0 : index
    %c0_2 = arith.constant 0 : index
    %1 = vector.load %arg3[%c0_1, %c0_2] : memref<16x32xf32, #tpu.memory_space<vmem>>, vector<16x32xf32>
    %cst = arith.constant dense<0.000000e+00> : vector<8x32xf32>
    %2 = tpu.matmul %0, %1, %cst {dimension_numbers = #tpu.dot_dimension_numbers<[1], [0], [0], [1], [0, 0, 1, 1], [], []>} : vector<8x16xf32>, vector<16x32xf32>, vector<8x32xf32> -> vector<8x32xf32>
    %c0_3 = arith.constant 0 : index
    %c0_4 = arith.constant 0 : index
    %3 = vector.load %arg4[%c0_3, %c0_4] : memref<1x32xf32, #tpu.memory_space<vmem>>, vector<1x32xf32>
    %4 = vector.broadcast %3 : vector<1x32xf32> to vector<8x32xf32>
    %5 = arith.addf %2, %4 : vector<8x32xf32>
    %cst_5 = arith.constant 0.000000e+00 : f32
    %6 = vector.broadcast %cst_5 : f32 to vector<8x32xf32>
    %7 = arith.maximumf %5, %6 : vector<8x32xf32>
    %c0_6 = arith.constant 0 : index
    %c0_7 = arith.constant 0 : index
    %8 = vector.load %arg5[%c0_6, %c0_7] : memref<32x32xf32, #tpu.memory_space<vmem>>, vector<32x32xf32>
    %cst_8 = arith.constant dense<0.000000e+00> : vector<8x32xf32>
    %9 = tpu.matmul %7, %8, %cst_8 {dimension_numbers = #tpu.dot_dimension_numbers<[1], [0], [0], [1], [0, 0, 1, 1], [], []>} : vector<8x32xf32>, vector<32x32xf32>, vector<8x32xf32> -> vector<8x32xf32>
    %c0_9 = arith.constant 0 : index
    %c0_10 = arith.constant 0 : index
    %10 = vector.load %arg2[%c0_9, %c0_10] : memref<8x4xf32, #tpu.memory_space<vmem>>, vector<8x4xf32>
    %c0_11 = arith.constant 0 : index
    %c0_12 = arith.constant 0 : index
    %11 = vector.load %arg6[%c0_11, %c0_12] : memref<4x32xf32, #tpu.memory_space<vmem>>, vector<4x32xf32>
    %cst_13 = arith.constant dense<0.000000e+00> : vector<8x32xf32>
    %12 = tpu.matmul %10, %11, %cst_13 {dimension_numbers = #tpu.dot_dimension_numbers<[1], [0], [0], [1], [0, 0, 1, 1], [], []>} : vector<8x4xf32>, vector<4x32xf32>, vector<8x32xf32> -> vector<8x32xf32>
    %13 = arith.addf %9, %12 : vector<8x32xf32>
    %c0_14 = arith.constant 0 : index
    %c0_15 = arith.constant 0 : index
    %14 = vector.load %arg7[%c0_14, %c0_15] : memref<1x32xf32, #tpu.memory_space<vmem>>, vector<1x32xf32>
    %15 = vector.broadcast %14 : vector<1x32xf32> to vector<8x32xf32>
    %16 = arith.addf %13, %15 : vector<8x32xf32>
    %cst_16 = arith.constant 0.000000e+00 : f32
    %17 = vector.broadcast %cst_16 : f32 to vector<8x32xf32>
    %18 = arith.maximumf %16, %17 : vector<8x32xf32>
    %c0_17 = arith.constant 0 : index
    %c0_18 = arith.constant 0 : index
    %19 = vector.load %arg8[%c0_17, %c0_18] : memref<8x32xf32, #tpu.memory_space<vmem>>, vector<8x32xf32>
    %cst_19 = arith.constant dense<0.000000e+00> : vector<8x8xf32>
    %20 = tpu.matmul %19, %18, %cst_19 {dimension_numbers = #tpu.dot_dimension_numbers<[1], [1], [0], [0], [0, 0, 1, 0], [], []>} : vector<8x32xf32>, vector<8x32xf32>, vector<8x8xf32> -> vector<8x8xf32>
    %c0_20 = arith.constant 0 : index
    %c0_21 = arith.constant 0 : index
    %21 = vector.load %arg9[%c0_20, %c0_21] : memref<8x1xf32, #tpu.memory_space<vmem>>, vector<8x1xf32>
    %22 = vector.broadcast %21 : vector<8x1xf32> to vector<8x8xf32>
    %23 = arith.addf %20, %22 : vector<8x8xf32>
    %c0_22 = arith.constant 0 : index
    %c0_23 = arith.constant 0 : index
    %24 = vector.load %arg10[%c0_22, %c0_23] : memref<8x8xf32, #tpu.memory_space<vmem>>, vector<8x8xf32>
    tpu.vector_store %arg10[%c0_22, %c0_23], %23 {strides = array<i32>} : memref<8x8xf32, #tpu.memory_space<vmem>>, vector<8x8xf32>,
    return
  }
  func.func @transform_0(%arg0: i32) -> (i32, i32) {
    %c0_i32 = arith.constant 0 : i32
    %c0_i32_0 = arith.constant 0 : i32
    return %arg0, %c0_i32 : i32, i32
  }
  func.func @transform_1(%arg0: i32) -> (i32, i32) {
    %c0_i32 = arith.constant 0 : i32
    %c0_i32_0 = arith.constant 0 : i32
    return %arg0, %c0_i32 : i32, i32
  }
  func.func @transform_2(%arg0: i32) -> (i32, i32) {
    %c0_i32 = arith.constant 0 : i32
    %c0_i32_0 = arith.constant 0 : i32
    %c0_i32_1 = arith.constant 0 : i32
    return %c0_i32, %c0_i32_0 : i32, i32
  }
  func.func @transform_3(%arg0: i32) -> (i32, i32) {
    %c0_i32 = arith.constant 0 : i32
    %c0_i32_0 = arith.constant 0 : i32
    %c0_i32_1 = arith.constant 0 : i32
    return %c0_i32, %c0_i32_0 : i32, i32
  }
  func.func @transform_4(%arg0: i32) -> (i32, i32) {
    %c0_i32 = arith.constant 0 : i32
    %c0_i32_0 = arith.constant 0 : i32
    %c0_i32_1 = arith.constant 0 : i32
    return %c0_i32, %c0_i32_0 : i32, i32
  }
  func.func @transform_5(%arg0: i32) -> (i32, i32) {
    %c0_i32 = arith.constant 0 : i32
    %c0_i32_0 = arith.constant 0 : i32
    %c0_i32_1 = arith.constant 0 : i32
    return %c0_i32, %c0_i32_0 : i32, i32
  }
  func.func @transform_6(%arg0: i32) -> (i32, i32) {
    %c0_i32 = arith.constant 0 : i32
    %c0_i32_0 = arith.constant 0 : i32
    %c0_i32_1 = arith.constant 0 : i32
    return %c0_i32, %c0_i32_0 : i32, i32
  }
  func.func @transform_7(%arg0: i32) -> (i32, i32) {
    %c0_i32 = arith.constant 0 : i32
    %c0_i32_0 = arith.constant 0 : i32
    %c0_i32_1 = arith.constant 0 : i32
    return %c0_i32, %c0_i32_0 : i32, i32
  }
  func.func @transform_8(%arg0: i32) -> (i32, i32) {
    %c0_i32 = arith.constant 0 : i32
    %c0_i32_0 = arith.constant 0 : i32
    %c0_i32_1 = arith.constant 0 : i32
    return %c0_i32, %c0_i32_0 : i32, i32
  }
  func.func @transform_9(%arg0: i32) -> (i32, i32) {
    %c0_i32 = arith.constant 0 : i32
    %c0_i32_0 = arith.constant 0 : i32
    return %c0_i32, %arg0 : i32, i32
  }
}

</mosaic_0001>

<llo_original>
// kernel: tpu_custom_call.1
$region0: #{tpu_custom_call.1}
  #allocation0 [shape = 'u32[]', space=smem, size = 0x4, offset = 0x4, fixed_abs, tag = 'smem constant byte address 0x4 - core index']
  #allocation1 [shape = 'u32[144,128]{1,0:T(1,128)}', space=vmem, size = 0x12000, scoped, tag = 'internal scratch']
  %s0 = inlined_call_operand.hbm [shape: f32[8,16], index: 0, kind: input, shape index: {}]
  %s1 = inlined_call_operand.vmem [shape: f32[8,4], index: 1, kind: input, shape index: {}]
  %s2 = inlined_call_operand.hbm [shape: f32[16,32], index: 2, kind: input, shape index: {}]
  %s3 = inlined_call_operand.vmem [shape: f32[1,32], index: 3, kind: input, shape index: {}]
  %s4 = inlined_call_operand.vmem [shape: f32[32,32], index: 4, kind: input, shape index: {}]
  %s5 = inlined_call_operand.hbm [shape: f32[4,32], index: 5, kind: input, shape index: {}]
  %s6 = inlined_call_operand.vmem [shape: f32[1,32], index: 6, kind: input, shape index: {}]
  %s7 = inlined_call_operand.vmem [shape: f32[8,32], index: 7, kind: input, shape index: {}]
  %s8 = inlined_call_operand.vmem [shape: f32[8,1], index: 8, kind: input, shape index: {}]
  %s9 = inlined_call_operand.hbm [shape: f32[8,8], index: 9, kind: output, shape index: {}]
  %s10 = sld [smem:[#allocation0]]
  $region58: #{tpu_custom_call.1} parent=0
    _
  %s12 = ssub.s32 1, %s10
  %s13 = scalar_select 0, %s12, %s10
  $region1: #{tpu_custom_call.1} parent=0
    #allocation2 [shape = 'u8[4096]{0}', space=vmem, size = 0x1000, scoped, tag = 'input window, operand 0, single buffered']
    #allocation3 [shape = 's32[1]{0}', space=sflag, size = 0x4, scoped, tag = 'scoped memory for tpu_custom_call.1']
    #allocation4 [shape = 's32[1]{0}', space=sflag, size = 0x4, scoped, tag = 'scoped memory for tpu_custom_call.1']
    #allocation5 [shape = 'u8[8192]{0}', space=vmem, size = 0x2000, scoped, tag = 'input window, operand 2, single buffered']
    #allocation6 [shape = 's32[1]{0}', space=sflag, size = 0x4, scoped, tag = 'scoped memory for tpu_custom_call.1']
    #allocation7 [shape = 'u8[2048]{0}', space=vmem, size = 0x800, scoped, tag = 'input window, operand 5, single buffered']
    #allocation8 [shape = 'u8[4096]{0}', space=vmem, size = 0x1000, scoped, tag = 'output window, operand 0, single buffered']
    %14 = vsyncpa [#allocation3], 0
    %15 = vsyncpa [#allocation6], 0
    %16 = vsyncpa [#allocation4], 0
    // Predicated region
    $region2: #{tpu_custom_call.1} parent=1 // pred_check
      _
    $region3: #{tpu_custom_call.1} parent=1 // pred_check_branch
      %18 = sbr.rel (0) target = $region5
    $region4: #{tpu_custom_call.1} parent=1 // pred_region
      %s20 = ssub.s32 128, 128
      %21 = vsyncadd [#allocation3], %s20
      %s23 = sshll.u32 [#allocation2], 4
      %s24 = int_to_ptr.vmem [resolvable:$true] %s23
      %26 = dma.hbm_to_vmem [thread:$0]  %s0, 128, %s24, [#allocation3]
    $region5: #{tpu_custom_call.1} parent=1 // pred_fallthru
      _
    // Predicated region
    $region6: #{tpu_custom_call.1} parent=1 // pred_check
      _
    $region7: #{tpu_custom_call.1} parent=1 // pred_check_branch
      %28 = sbr.rel (0) target = $region9
    $region8: #{tpu_custom_call.1} parent=1 // pred_region
      _
    $region9: #{tpu_custom_call.1} parent=1 // pred_fallthru
      _
    // Predicated region
    $region10: #{tpu_custom_call.1} parent=1 // pred_check
      _
    $region11: #{tpu_custom_call.1} parent=1 // pred_check_branch
      %30 = sbr.rel (0) target = $region13
    $region12: #{tpu_custom_call.1} parent=1 // pred_region
      %s32 = ssub.s32 256, 256
      %33 = vsyncadd [#allocation6], %s32
      %s34 = sshll.u32 [#allocation5], 4
      %s35 = int_to_ptr.vmem [resolvable:$true] %s34
      %40 = dma.hbm_to_vmem [thread:$0]  %s2, 256, %s35, [#allocation6], 128, 128, 8
    $region13: #{tpu_custom_call.1} parent=1 // pred_fallthru
      _
    // Predicated region
    $region14: #{tpu_custom_call.1} parent=1 // pred_check
      _
    $region15: #{tpu_custom_call.1} parent=1 // pred_check_branch
      %42 = sbr.rel (0) target = $region17
    $region16: #{tpu_custom_call.1} parent=1 // pred_region
      _
    $region17: #{tpu_custom_call.1} parent=1 // pred_fallthru
      _
    // Predicated region
    $region18: #{tpu_custom_call.1} parent=1 // pred_check
      _
    $region19: #{tpu_custom_call.1} parent=1 // pred_check_branch
      %44 = sbr.rel (0) target = $region21
    $region20: #{tpu_custom_call.1} parent=1 // pred_region
      _
    $region21: #{tpu_custom_call.1} parent=1 // pred_fallthru
      _
    // Predicated region
    $region22: #{tpu_custom_call.1} parent=1 // pred_check
      _
    $region23: #{tpu_custom_call.1} parent=1 // pred_check_branch
      %46 = sbr.rel (0) target = $region25
    $region24: #{tpu_custom_call.1} parent=1 // pred_region
      %s48 = ssub.s32 64, 64
      %49 = vsyncadd [#allocation6], %s48
      %s51 = sshll.u32 [#allocation7], 4
      %s52 = int_to_ptr.vmem [resolvable:$true] %s51
      %54 = dma.hbm_to_vmem [thread:$0]  %s5, 64, %s52, [#allocation6]
    $region25: #{tpu_custom_call.1} parent=1 // pred_fallthru
      _
    // Predicated region
    $region26: #{tpu_custom_call.1} parent=1 // pred_check
      _
    $region27: #{tpu_custom_call.1} parent=1 // pred_check_branch
      %56 = sbr.rel (0) target = $region29
    $region28: #{tpu_custom_call.1} parent=1 // pred_region
      _
    $region29: #{tpu_custom_call.1} parent=1 // pred_fallthru
      _
    // Predicated region
    $region30: #{tpu_custom_call.1} parent=1 // pred_check
      _
    $region31: #{tpu_custom_call.1} parent=1 // pred_check_branch
      %58 = sbr.rel (0) target = $region33
    $region32: #{tpu_custom_call.1} parent=1 // pred_region
      _
    $region33: #{tpu_custom_call.1} parent=1 // pred_fallthru
      _
    // Predicated region
    $region34: #{tpu_custom_call.1} parent=1 // pred_check
      _
    $region35: #{tpu_custom_call.1} parent=1 // pred_check_branch
      %60 = sbr.rel (0) target = $region37
    $region36: #{tpu_custom_call.1} parent=1 // pred_region
      _
    $region37: #{tpu_custom_call.1} parent=1 // pred_fallthru
      _
    // Predicated region
    $region38: #{tpu_custom_call.1} parent=1 // pred_check
      _
    $region39: #{tpu_custom_call.1} parent=1 // pred_check_branch
      %62 = sbr.rel (0) target = $region41
    $region40: #{tpu_custom_call.1} parent=1 // pred_region
      %63 = dma.done [#allocation3], 128
    $region41: #{tpu_custom_call.1} parent=1 // pred_fallthru
      _
    // Predicated region
    $region42: #{tpu_custom_call.1} parent=1 // pred_check
      _
    $region43: #{tpu_custom_call.1} parent=1 // pred_check_branch
      %65 = sbr.rel (0) target = $region45
    $region44: #{tpu_custom_call.1} parent=1 // pred_region
      %66 = dma.done [#allocation6], 256
    $region45: #{tpu_custom_call.1} parent=1 // pred_fallthru
      _
    // Predicated region
    $region46: #{tpu_custom_call.1} parent=1 // pred_check
      _
    $region47: #{tpu_custom_call.1} parent=1 // pred_check_branch
      %68 = sbr.rel (0) target = $region49
    $region48: #{tpu_custom_call.1} parent=1 // pred_region
      %69 = dma.done [#allocation6], 64
    $region49: #{tpu_custom_call.1} parent=1 // pred_fallthru
      _
    %v70 = vld [vmem:[#allocation2] sm:$0xff]
    %v71 = vld [vmem:[#allocation5] sm:$0xff]
    %v72 = vld [vmem:[#allocation5 + $0x8] sm:$0xff]
    %v73 = vld [vmem:[%s3] sm:$0x1]
    %v75 = vlaneseq
    %v76 = vshrl.u32 %v75, 7
    %v77 = vsub.s32 0, %v76
    %v78 = vrot.slane %v73, %v77
    %vm80 = vcmask 130048
    %v82 = vsel %vm80, %v70, 0
    %84 = vmatprep.subr.mxu0 0.0
    %85 = vmatpush1.msra.mxu0 %v71
    %86 = vmatprep.subr.mxu0 0.0
    %87 = vmatpush1.msra.mxu0 %v72
    %88 = vmatprep.subr.mxu0 0.0
    %89 = vmatpush1.msra.mxu0 0.0
    %90 = vmatprep.subr.mxu0 0.0
    %91 = vmatpush1.msra.mxu0 0.0
    %92 = vmatprep.subr.mxu0 0.0
    %93 = vmatpush1.msra.mxu0 0.0
    %94 = vmatprep.subr.mxu0 0.0
    %95 = vmatpush1.msra.mxu0 0.0
    %96 = vmatprep.subr.mxu0 0.0
    %97 = vmatpush1.msra.mxu0 0.0
    %98 = vmatprep.subr.mxu0 0.0
    %99 = vmatpush1.msra.mxu0 0.0
    %100 = vmatprep.subr.mxu0 0.0
    %101 = vmatpush1.msra.mxu0 0.0
    %102 = vmatprep.subr.mxu0 0.0
    %103 = vmatpush1.msra.mxu0 0.0
    %104 = vmatprep.subr.mxu0 0.0
    %105 = vmatpush1.msra.mxu0 0.0
    %106 = vmatprep.subr.mxu0 0.0
    %107 = vmatpush1.msra.mxu0 0.0
    %108 = vmatprep.subr.mxu0 0.0
    %109 = vmatpush1.msra.mxu0 0.0
    %110 = vmatprep.subr.mxu0 0.0
    %111 = vmatpush1.msra.mxu0 0.0
    %112 = vmatprep.subr.mxu0 0.0
    %113 = vmatpush1.msra.mxu0 0.0
    %114 = vmatprep.subr.mxu0 0.0
    %115 = vmatpush1.msra.mxu0 0.0
    %116 = vmatprep.subr.mxu0 0.0
    %117 = vmatpush1.msra.mxu0 0.0
    %118 = vmatprep.subr.mxu0 0.0
    %119 = vmatpush1.msra.mxu0 0.0
    %120 = vmatprep.subr.mxu0 0.0
    %121 = vmatpush1.msra.mxu0 0.0
    %122 = vmatprep.subr.mxu0 0.0
    %123 = vmatpush1.msra.mxu0 0.0
    %124 = vmatprep.subr.mxu0 0.0
    %125 = vmatpush1.msra.mxu0 0.0
    %126 = vmatprep.subr.mxu0 0.0
    %127 = vmatpush1.msra.mxu0 0.0
    %128 = vmatprep.subr.mxu0 0.0
    %129 = vmatpush1.msra.mxu0 0.0
    %130 = vmatprep.subr.mxu0 0.0
    %131 = vmatpush1.msra.mxu0 0.0
    %132 = vmatprep.subr.mxu0 0.0
    %133 = vmatpush1.msra.mxu0 0.0
    %134 = vmatprep.subr.mxu0 0.0
    %135 = vmatpush1.msra.mxu0 0.0
    %136 = vmatprep.subr.mxu0 0.0
    %137 = vmatpush1.msra.mxu0 0.0
    %138 = vmatprep.subr.mxu0 0.0
    %139 = vmatpush1.msra.mxu0 0.0
    %140 = vmatprep.subr.mxu0 0.0
    %141 = vmatpush1.msra.mxu0 0.0
    %142 = vmatprep.subr.mxu0 0.0
    %143 = vmatpush1.msra.mxu0 0.0
    %144 = vmatprep.subr.mxu0 0.0
    %145 = vmatpush1.msra.mxu0 0.0
    %146 = vmatprep.subr.mxu0 0.0
    %147 = vmatpush1.msra.mxu0 0.0
    %148 = vmatprep.mubr.f32.mxu0 0.0
    %149 = vmatmul.mubr.f32.gmra.mrb[0].mxu0 %v82
    %v150 = vpop.f32.mrb[0].mxu0
    %v151 = vadd.f32 %v78, %v150
    %v152 = vpop.f32.mrb[0].mxu0
    %153 = vdwg.mxu0
    %v154 = vmax.f32 %v151, 0.0
    %v155 = vld [vmem:[%s4] sm:$0xff]
    %v156 = vld [vmem:[%s4 + $0x8] sm:$0xff]
    %v157 = vld [vmem:[%s4 + $0x10] sm:$0xff]
    %v158 = vld [vmem:[%s4 + $0x18] sm:$0xff]
    %v159 = vld [vmem:[%s1] sm:$0xff]
    %v160 = vld [vmem:[#allocation7] sm:$0xf]
    %vm161 = vcmask 31744
    %v163 = vsel %vm161, %v159, 0
    %vm165 = vcmask 1043456
    %v167 = vsel %vm165, %v160, 0
    %169 = vmatprep.subr.mxu0 0.0
    %170 = vmatpush1.msra.mxu0 %v167
    %171 = vmatprep.subr.mxu0 0.0
    %172 = vmatpush1.msra.mxu0 0.0
    %173 = vmatprep.subr.mxu0 0.0
    %174 = vmatpush1.msra.mxu0 0.0
    %175 = vmatprep.subr.mxu0 0.0
    %176 = vmatpush1.msra.mxu0 0.0
    %177 = vmatprep.subr.mxu0 0.0
    %178 = vmatpush1.msra.mxu0 0.0
    %179 = vmatprep.subr.mxu0 0.0
    %180 = vmatpush1.msra.mxu0 0.0
    %181 = vmatprep.subr.mxu0 0.0
    %182 = vmatpush1.msra.mxu0 0.0
    %183 = vmatprep.subr.mxu0 0.0
    %184 = vmatpush1.msra.mxu0 0.0
    %185 = vmatprep.subr.mxu0 0.0
    %186 = vmatpush1.msra.mxu0 0.0
    %187 = vmatprep.subr.mxu0 0.0
    %188 = vmatpush1.msra.mxu0 0.0
    %189 = vmatprep.subr.mxu0 0.0
    %190 = vmatpush1.msra.mxu0 0.0
    %191 = vmatprep.subr.mxu0 0.0
    %192 = vmatpush1.msra.mxu0 0.0
    %193 = vmatprep.subr.mxu0 0.0
    %194 = vmatpush1.msra.mxu0 0.0
    %195 = vmatprep.subr.mxu0 0.0
    %196 = vmatpush1.msra.mxu0 0.0
    %197 = vmatprep.subr.mxu0 0.0
    %198 = vmatpush1.msra.mxu0 0.0
    %199 = vmatprep.subr.mxu0 0.0
    %200 = vmatpush1.msra.mxu0 0.0
    %201 = vmatprep.subr.mxu0 0.0
    %202 = vmatpush1.msra.mxu0 0.0
    %203 = vmatprep.subr.mxu0 0.0
    %204 = vmatpush1.msra.mxu0 0.0
    %205 = vmatprep.subr.mxu0 0.0
    %206 = vmatpush1.msra.mxu0 0.0
    %207 = vmatprep.subr.mxu0 0.0
    %208 = vmatpush1.msra.mxu0 0.0
    %209 = vmatprep.subr.mxu0 0.0
    %210 = vmatpush1.msra.mxu0 0.0
    %211 = vmatprep.subr.mxu0 0.0
    %212 = vmatpush1.msra.mxu0 0.0
    %213 = vmatprep.subr.mxu0 0.0
    %214 = vmatpush1.msra.mxu0 0.0
    %215 = vmatprep.subr.mxu0 0.0
    %216 = vmatpush1.msra.mxu0 0.0
    %217 = vmatprep.subr.mxu0 0.0
    %218 = vmatpush1.msra.mxu0 0.0
    %219 = vmatprep.subr.mxu0 0.0
    %220 = vmatpush1.msra.mxu0 0.0
    %221 = vmatprep.subr.mxu0 0.0
    %222 = vmatpush1.msra.mxu0 0.0
    %223 = vmatprep.subr.mxu0 0.0
    %224 = vmatpush1.msra.mxu0 0.0
    %225 = vmatprep.subr.mxu0 0.0
    %226 = vmatpush1.msra.mxu0 0.0
    %227 = vmatprep.subr.mxu0 0.0
    %228 = vmatpush1.msra.mxu0 0.0
    %229 = vmatprep.subr.mxu0 0.0
    %230 = vmatpush1.msra.mxu0 0.0
    %231 = vmatprep.subr.mxu0 0.0
    %232 = vmatpush1.msra.mxu0 0.0
    %233 = vmatprep.mubr.f32.mxu0 0.0
    %234 = vmatmul.mubr.f32.gmra.mrb[0].mxu0 %v163
    %v235 = vpop.f32.mrb[0].mxu0
    %v236 = vadd.f32 0.0, %v235
    %v237 = vpop.f32.mrb[0].mxu0
    %238 = vdwg.mxu0
    %vm239 = vcmask 261120
    %v241 = vsel %vm239, %v154, 0
    %243 = vmatprep.subr.mxu0 0.0
    %244 = vmatpush1.msra.mxu0 %v155
    %245 = vmatprep.subr.mxu0 0.0
    %246 = vmatpush1.msra.mxu0 %v156
    %247 = vmatprep.subr.mxu0 0.0
    %248 = vmatpush1.msra.mxu0 %v157
    %249 = vmatprep.subr.mxu0 0.0
    %250 = vmatpush1.msra.mxu0 %v158
    %251 = vmatprep.subr.mxu0 0.0
    %252 = vmatpush1.msra.mxu0 0.0
    %253 = vmatprep.subr.mxu0 0.0
    %254 = vmatpush1.msra.mxu0 0.0
    %255 = vmatprep.subr.mxu0 0.0
    %256 = vmatpush1.msra.mxu0 0.0
    %257 = vmatprep.subr.mxu0 0.0
    %258 = vmatpush1.msra.mxu0 0.0
    %259 = vmatprep.subr.mxu0 0.0
    %260 = vmatpush1.msra.mxu0 0.0
    %261 = vmatprep.subr.mxu0 0.0
    %262 = vmatpush1.msra.mxu0 0.0
    %263 = vmatprep.subr.mxu0 0.0
    %264 = vmatpush1.msra.mxu0 0.0
    %265 = vmatprep.subr.mxu0 0.0
    %266 = vmatpush1.msra.mxu0 0.0
    %267 = vmatprep.subr.mxu0 0.0
    %268 = vmatpush1.msra.mxu0 0.0
    %269 = vmatprep.subr.mxu0 0.0
    %270 = vmatpush1.msra.mxu0 0.0
    %271 = vmatprep.subr.mxu0 0.0
    %272 = vmatpush1.msra.mxu0 0.0
    %273 = vmatprep.subr.mxu0 0.0
    %274 = vmatpush1.msra.mxu0 0.0
    %275 = vmatprep.subr.mxu0 0.0
    %276 = vmatpush1.msra.mxu0 0.0
    %277 = vmatprep.subr.mxu0 0.0
    %278 = vmatpush1.msra.mxu0 0.0
    %279 = vmatprep.subr.mxu0 0.0
    %280 = vmatpush1.msra.mxu0 0.0
    %281 = vmatprep.subr.mxu0 0.0
    %282 = vmatpush1.msra.mxu0 0.0
    %283 = vmatprep.subr.mxu0 0.0
    %284 = vmatpush1.msra.mxu0 0.0
    %285 = vmatprep.subr.mxu0 0.0
    %286 = vmatpush1.msra.mxu0 0.0
    %287 = vmatprep.subr.mxu0 0.0
    %288 = vmatpush1.msra.mxu0 0.0
    %289 = vmatprep.subr.mxu0 0.0
    %290 = vmatpush1.msra.mxu0 0.0
    %291 = vmatprep.subr.mxu0 0.0
    %292 = vmatpush1.msra.mxu0 0.0
    %293 = vmatprep.subr.mxu0 0.0
    %294 = vmatpush1.msra.mxu0 0.0
    %295 = vmatprep.subr.mxu0 0.0
    %296 = vmatpush1.msra.mxu0 0.0
    %297 = vmatprep.subr.mxu0 0.0
    %298 = vmatpush1.msra.mxu0 0.0
    %299 = vmatprep.subr.mxu0 0.0
    %300 = vmatpush1.msra.mxu0 0.0
    %301 = vmatprep.subr.mxu0 0.0
    %302 = vmatpush1.msra.mxu0 0.0
    %303 = vmatprep.subr.mxu0 0.0
    %304 = vmatpush1.msra.mxu0 0.0
    %305 = vmatprep.subr.mxu0 0.0
    %306 = vmatpush1.msra.mxu0 0.0
    %307 = vmatprep.mubr.f32.mxu0 0.0
    %308 = vmatmul.mubr.f32.gmra.mrb[0].mxu0 %v241
    %v309 = vpop.f32.mrb[0].mxu0
    %v310 = vadd.f32 %v236, %v309
    %v311 = vpop.f32.mrb[0].mxu0
    %312 = vdwg.mxu0
    %v313 = vld [vmem:[%s6] sm:$0x1]
    %v315 = vlaneseq
    %v316 = vshrl.u32 %v315, 7
    %v317 = vsub.s32 0, %v316
    %v318 = vrot.slane %v313, %v317
    %v320 = vadd.f32 %v310, %v318
    %v321 = vmax.f32 %v320, 0.0
    %v322 = vld [vmem:[%s7] sm:$0xff]
    %v323 = vld [vmem:[%s8] sm:$0xff]
    %325 = vset.pattern.permute.xlu0 0
    %326 = vperm.xlu0 %325, %v323
    %v327 = vpop.permute.xlu0 %326
    %v330 = vsel %vm239, %v322, 0
    %v333 = vsel %vm239, %v321, 0
    %335 = vmatprep.subr.mxu0 0.0
    %336 = vmatpush1.xpose.msra.mxu0 %v333
    %337 = vmatprep.subr.mxu0 0.0
    %338 = vmatpush1.xpose.msra.mxu0 0.0
    %339 = vmatprep.subr.mxu0 0.0
    %340 = vmatpush1.xpose.msra.mxu0 0.0
    %341 = vmatprep.subr.mxu0 0.0
    %342 = vmatpush1.xpose.msra.mxu0 0.0
    %343 = vmatprep.subr.mxu0 0.0
    %344 = vmatpush1.xpose.msra.mxu0 0.0
    %345 = vmatprep.subr.mxu0 0.0
    %346 = vmatpush1.xpose.msra.mxu0 0.0
    %347 = vmatprep.subr.mxu0 0.0
    %348 = vmatpush1.xpose.msra.mxu0 0.0
    %349 = vmatprep.subr.mxu0 0.0
    %350 = vmatpush1.xpose.msra.mxu0 0.0
    %351 = vmatprep.subr.mxu0 0.0
    %352 = vmatpush1.xpose.msra.mxu0 0.0
    %353 = vmatprep.subr.mxu0 0.0
    %354 = vmatpush1.xpose.msra.mxu0 0.0
    %355 = vmatprep.subr.mxu0 0.0
    %356 = vmatpush1.xpose.msra.mxu0 0.0
    %357 = vmatprep.subr.mxu0 0.0
    %358 = vmatpush1.xpose.msra.mxu0 0.0
    %359 = vmatprep.subr.mxu0 0.0
    %360 = vmatpush1.xpose.msra.mxu0 0.0
    %361 = vmatprep.subr.mxu0 0.0
    %362 = vmatpush1.xpose.msra.mxu0 0.0
    %363 = vmatprep.subr.mxu0 0.0
    %364 = vmatpush1.xpose.msra.mxu0 0.0
    %365 = vmatprep.subr.mxu0 0.0
    %366 = vmatpush1.xpose.msra.mxu0 0.0
    %367 = vmatprep.subr.mxu0 0.0
    %368 = vmatpush1.xpose.msra.mxu0 0.0
    %369 = vmatprep.subr.mxu0 0.0
    %370 = vmatpush1.xpose.msra.mxu0 0.0
    %371 = vmatprep.subr.mxu0 0.0
    %372 = vmatpush1.xpose.msra.mxu0 0.0
    %373 = vmatprep.subr.mxu0 0.0
    %374 = vmatpush1.xpose.msra.mxu0 0.0
    %375 = vmatprep.subr.mxu0 0.0
    %376 = vmatpush1.xpose.msra.mxu0 0.0
    %377 = vmatprep.subr.mxu0 0.0
    %378 = vmatpush1.xpose.msra.mxu0 0.0
    %379 = vmatprep.subr.mxu0 0.0
    %380 = vmatpush1.xpose.msra.mxu0 0.0
    %381 = vmatprep.subr.mxu0 0.0
    %382 = vmatpush1.xpose.msra.mxu0 0.0
    %383 = vmatprep.subr.mxu0 0.0
    %384 = vmatpush1.xpose.msra.mxu0 0.0
    %385 = vmatprep.subr.mxu0 0.0
    %386 = vmatpush1.xpose.msra.mxu0 0.0
    %387 = vmatprep.subr.mxu0 0.0
    %388 = vmatpush1.xpose.msra.mxu0 0.0
    %389 = vmatprep.subr.mxu0 0.0
    %390 = vmatpush1.xpose.msra.mxu0 0.0
    %391 = vmatprep.subr.mxu0 0.0
    %392 = vmatpush1.xpose.msra.mxu0 0.0
    %393 = vmatprep.subr.mxu0 0.0
    %394 = vmatpush1.xpose.msra.mxu0 0.0
    %395 = vmatprep.subr.mxu0 0.0
    %396 = vmatpush1.xpose.msra.mxu0 0.0
    %397 = vmatprep.subr.mxu0 0.0
    %398 = vmatpush1.xpose.msra.mxu0 0.0
    %399 = vmatprep.mubr.f32.mxu0 0.0
    %400 = vmatmul.mubr.f32.gmra.mrb[0].mxu0 %v330
    %v401 = vpop.f32.mrb[0].mxu0
    %v402 = vadd.f32 %v327, %v401
    %v403 = vpop.f32.mrb[0].mxu0
    %404 = vdwg.mxu0
    %vm405 = vcmask 64512
    %406 = vst.msk [vmem:[#allocation8] sm:$0xff] %vm405, %v402
    // Predicated region
    $region50: #{tpu_custom_call.1} parent=1 // pred_check
      _
    $region51: #{tpu_custom_call.1} parent=1 // pred_check_branch
      %408 = sbr.rel (0) target = $region53
    $region52: #{tpu_custom_call.1} parent=1 // pred_region
      %s410 = ssub.s32 128, 128
      %411 = vsyncadd [#allocation4], %s410
      %s413 = sshll.u32 [#allocation8], 4
      %s414 = int_to_ptr.vmem [resolvable:$true] %s413
      %416 = dma.vmem_to_hbm [thread:$0]  %s414, 128, %s9, [#allocation4]
    $region53: #{tpu_custom_call.1} parent=1 // pred_fallthru
      _
    // Predicated region
    $region54: #{tpu_custom_call.1} parent=1 // pred_check
      _
    $region55: #{tpu_custom_call.1} parent=1 // pred_check_branch
      %418 = sbr.rel (0) target = $region57
    $region56: #{tpu_custom_call.1} parent=1 // pred_region
      %419 = dma.done [#allocation4], 128
    $region57: #{tpu_custom_call.1} parent=1 // pred_fallthru
      _
    %420 = vsyncpa [#allocation3], 1
    %421 = vsyncpa [#allocation6], 1
    %422 = vsyncpa [#allocation4], 1

</llo_original>
